<compile_context>
chip_gen: v5e
topology: v5e:2x2
jax: 0.10.0
libtpu: 0.0.40
codegen_flags: <defaults>
</compile_context>

<pallas_src>
import functools

import jax
import jax.numpy as jnp
from jax.experimental import pallas as pl
from jax.experimental.pallas import tpu as pltpu

NEG_SLOPE = 0.02          # the module explicitly sets negative_slope=0.02
LANE = 128
_VMEM_LIMIT = 32 * 1024 * 1024


def _round_up(x, m):
    return (x + m - 1) // m * m


def _apply_act(x, act):
    if act == "none":
        return x
    if act == "leaky":
        return jnp.where(x > 0, x, NEG_SLOPE * x)
    raise ValueError(f"unknown act {act}")


# ----------------------------------------------------------------------------
# pltpu.roll direction probe (run once, cached) so the GRU sublane shifts are
# correct regardless of rotate-direction convention.
# ----------------------------------------------------------------------------
_ROLL_NUMPY = None


def _roll_is_numpy_semantics():
    """True iff pltpu.roll(x, s, axis) == np.roll(x, s, axis)."""
    global _ROLL_NUMPY
    if _ROLL_NUMPY is None:
        def k(x_ref, o_ref):
            o_ref[...] = pltpu.roll(x_ref[...], shift=1, axis=0)
        x = jnp.broadcast_to(jnp.arange(8, dtype=jnp.float32)[:, None],
                             (8, LANE))
        y = pl.pallas_call(
            k, out_shape=jax.ShapeDtypeStruct((8, LANE), jnp.float32))(x)
        _ROLL_NUMPY = bool(y[1, 0] == 0.0)   # np.roll: y[1] == x[0] == 0
    return _ROLL_NUMPY


# ----------------------------------------------------------------------------
# Generic lane-dense matmul + bias + activation kernel (all convs route here).
# ----------------------------------------------------------------------------
def _mm_kernel(x_ref, w_ref, b_ref, o_ref, *, act):
    acc = jnp.dot(x_ref[...], w_ref[...], preferred_element_type=jnp.float32)
    acc = acc + b_ref[...]
    o_ref[...] = _apply_act(acc, act).astype(o_ref.dtype)


def matmul_bias_act(lhs, w, b, act, out_dtype=jnp.bfloat16):
    """lhs: (M, K) bf16, w: (K, N) bf16, b: (1, N) f32 -> (M, N) out_dtype."""
    M, K = lhs.shape
    _, N = w.shape
    tm = 512 if K <= 2048 else 256
    tm = min(tm, _round_up(M, 8))
    Mp = _round_up(M, tm)
    if Mp != M:
        lhs = jnp.pad(lhs, ((0, Mp - M), (0, 0)))
    out = pl.pallas_call(
        functools.partial(_mm_kernel, act=act),
        out_shape=jax.ShapeDtypeStruct((Mp, N), out_dtype),
        grid=(Mp // tm,),
        in_specs=[
            pl.BlockSpec((tm, K), lambda i: (i, 0)),
            pl.BlockSpec((K, N), lambda i: (0, 0)),
            pl.BlockSpec((1, N), lambda i: (0, 0)),
        ],
        out_specs=pl.BlockSpec((tm, N), lambda i: (i, 0)),
        compiler_params=pltpu.CompilerParams(
            dimension_semantics=("parallel",),
            vmem_limit_bytes=_VMEM_LIMIT),
    )(lhs, w, b)
    return out[:M] if Mp != M else out


# ----------------------------------------------------------------------------
# Convolution wrappers (im2col built with cheap XLA slices, channels-last).
# ----------------------------------------------------------------------------
def conv3d(x, w, b, cin, stride_hw, act):
    """3x3x3 conv, temporal stride 1, spatial stride stride_hw, padding 1."""
    B, T, H, W, _ = x.shape
    s = stride_hw
    xp = jnp.pad(x[..., :cin].astype(jnp.bfloat16),
                 ((0, 0), (1, 1), (1, 1), (1, 1), (0, 0)))
    Ho = (H - 1) // s + 1
    Wo = (W - 1) // s + 1
    cols = []
    for dt in range(3):
        for dh in range(3):
            for dw in range(3):
                cols.append(xp[:, dt:dt + T,
                               dh:dh + (Ho - 1) * s + 1:s,
                               dw:dw + (Wo - 1) * s + 1:s, :])
    patch = jnp.concatenate(cols, axis=-1)              # (B,T,Ho,Wo,27*cin)
    K = 27 * cin
    Kp = w.shape[0]
    if Kp != K:
        patch = jnp.pad(patch, ((0, 0),) * 4 + ((0, Kp - K),))
    lhs = patch.reshape(B * T * Ho * Wo, Kp)
    out = matmul_bias_act(lhs, w, b, act)
    return out.reshape(B, T, Ho, Wo, out.shape[-1])


def deconv3d_poly(x, w, b, cin, act):
    """ConvTranspose3d k=(3,4,4), stride=(1,2,2), pad=1 via polyphase:
    one K=12*cin, N=4*128 matmul over the low-res grid + depth-to-space."""
    B, T, Hl, Wl, _ = x.shape
    xp = jnp.pad(x[..., :cin].astype(jnp.bfloat16),
                 ((0, 0), (1, 1), (1, 1), (1, 1), (0, 0)))
    cols = []
    for dt in range(3):
        for a in range(2):
            for bb in range(2):
                cols.append(xp[:, dt:dt + T, a:a + Hl + 1, bb:bb + Wl + 1, :])
    patch = jnp.concatenate(cols, axis=-1)              # (B,T,Hl+1,Wl+1,12*cin)
    K = 12 * cin
    Kp = w.shape[0]
    if Kp != K:
        patch = jnp.pad(patch, ((0, 0),) * 4 + ((0, Kp - K),))
    lhs = patch.reshape(B * T * (Hl + 1) * (Wl + 1), Kp)
    r = matmul_bias_act(lhs, w, b, act)                 # (M, 512)
    r = r.reshape(B, T, Hl + 1, Wl + 1, 2, 2, LANE)
    rows = []
    for ph in (0, 1):
        rows.append(jnp.stack(
            [r[:, :, ph:ph + Hl, pw:pw + Wl, ph, pw, :] for pw in (0, 1)],
            axis=4))                                    # (B,T,Hl,Wl,2,C)
    out = jnp.stack(rows, axis=3)                       # (B,T,Hl,2,Wl,2,C)
    return out.reshape(B, T, 2 * Hl, 2 * Wl, LANE)


def _gru_xproj(x, wx, bx, in_dim):
    """Hoisted input-to-hidden projection of all frames: 3x3 conv -> [r|z|n]."""
    B, T, H, W, _ = x.shape
    xp = jnp.pad(x[..., :in_dim].astype(jnp.bfloat16),
                 ((0, 0), (0, 0), (1, 1), (1, 1), (0, 0)))
    cols = []
    for dh in range(3):
        for dw in range(3):
            cols.append(xp[:, :, dh:dh + H, dw:dw + W, :])
    patch = jnp.concatenate(cols, axis=-1)
    K = 9 * in_dim
    Kp = wx.shape[0]
    if Kp != K:
        patch = jnp.pad(patch, ((0, 0),) * 4 + ((0, Kp - K),))
    lhs = patch.reshape(B * T * H * W, Kp)
    out = matmul_bias_act(lhs, wx, bx, act="none")      # bf16 (halves HBM stream)
    return out.reshape(B, T, H, W, 3 * LANE)


# ----------------------------------------------------------------------------
# Fused ConvGRU recurrence: hidden state resident in VMEM, hidden->hidden conv
# as 3 per-dh matmuls (dw grouped along N) combined with XLU sublane rolls.
# ----------------------------------------------------------------------------
def _gru_kernel(xp_ref, wgh_ref, wch_ref, h0_ref, hs_ref, hl_ref, hpad_ref,
                *, H, W, TB, out_act, sh_m1, sh_p1):
    M = H * W
    s = pl.program_id(1)

    @pl.when(s == 0)
    def _init():
        hpad_ref[...] = jnp.zeros(hpad_ref.shape, hpad_ref.dtype)
        hpad_ref[1:H + 1] = h0_ref[0]

    # W-boundary masks for the shifted dw-taps (flattened (H*W) row layout).
    col = jax.lax.broadcasted_iota(jnp.int32, (M, 1), 0) % W
    not_first = (col != 0).astype(jnp.float32)       # tap reads w-1
    not_last = (col != (W - 1)).astype(jnp.float32)  # tap reads w+1

    def hconv(w_ref, nout):
        acc = jnp.zeros((M, nout), jnp.float32)
        for dh in range(3):
            slab = hpad_ref[dh:dh + H].reshape(M, LANE).astype(jnp.bfloat16)
            res = jnp.dot(slab, w_ref[dh],
                          preferred_element_type=jnp.float32)   # (M, 3*nout)
            left = pltpu.roll(res[:, 0:nout], shift=sh_m1, axis=0) * not_first
            mid = res[:, nout:2 * nout]
            right = pltpu.roll(res[:, 2 * nout:3 * nout],
                               shift=sh_p1, axis=0) * not_last
            acc = acc + left + mid + right
        return acc

    for tt in range(TB):
        xp = xp_ref[0, tt].astype(jnp.float32).reshape(M, 3 * LANE)
        h_cur = hpad_ref[1:H + 1].reshape(M, LANE)
        g = hconv(wgh_ref, 2 * LANE)
        r = jax.nn.sigmoid(xp[:, 0:LANE] + g[:, 0:LANE])
        z = jax.nn.sigmoid(xp[:, LANE:2 * LANE] + g[:, LANE:2 * LANE])
        hpad_ref[1:H + 1] = (r * h_cur).reshape(H, W, LANE)   # border stays 0
        c = hconv(wch_ref, LANE)
        n = jnp.tanh(xp[:, 2 * LANE:3 * LANE] + c)
        h_new = (1.0 - z) * h_cur + z * n
        hpad_ref[1:H + 1] = h_new.reshape(H, W, LANE)
        hs_ref[0, tt] = (_apply_act(h_new, out_act)
                         .reshape(H, W, LANE).astype(hs_ref.dtype))

    @pl.when(s == pl.num_programs(1) - 1)
    def _fin():
        hl_ref[0] = hpad_ref[1:H + 1]


def _pick_tb(T, H, W):
    """Frames per grid step: amortize pipeline overhead at small spatial."""
    frame = H * W * (3 * LANE + LANE) * 2   # xp + hs bytes per frame (bf16)
    tb = 1
    for cand in range(1, min(T, 8) + 1):
        if T % cand == 0 and 2 * cand * frame <= 8 * 1024 * 1024:
            tb = cand
    return tb


def conv_gru(x, gp, in_dim, h0=None, out_act="none"):
    """x: (B,T,H,W,C>=in_dim) channels-last.  Returns (hs, h_last)."""
    B, T, H, W, _ = x.shape
    xproj = _gru_xproj(x, gp["wx"], gp["bx"], in_dim)
    if h0 is None:
        h0 = jnp.zeros((B, H, W, LANE), jnp.float32)
    TB = _pick_tb(T, H, W)
    M = H * W
    np_roll = _roll_is_numpy_semantics()
    sh_m1 = 1 if np_roll else M - 1          # result[m] <- res[m-1]
    sh_p1 = (M - 1) if np_roll else 1        # result[m] <- res[m+1]
    kern = functools.partial(_gru_kernel, H=H, W=W, TB=TB, out_act=out_act,
                             sh_m1=sh_m1, sh_p1=sh_p1)
    hs, h_last = pl.pallas_call(
        kern,
        out_shape=(
            jax.ShapeDtypeStruct((B, T, H, W, LANE), jnp.bfloat16),
            jax.ShapeDtypeStruct((B, H, W, LANE), jnp.float32),
        ),
        grid=(B, T // TB),
        in_specs=[
            pl.BlockSpec((1, TB, H, W, 3 * LANE), lambda b, s: (b, s, 0, 0, 0)),
            pl.BlockSpec((3, LANE, 6 * LANE), lambda b, s: (0, 0, 0)),
            pl.BlockSpec((3, LANE, 3 * LANE), lambda b, s: (0, 0, 0)),
            pl.BlockSpec((1, H, W, LANE), lambda b, s: (b, 0, 0, 0)),
        ],
        out_specs=(
            pl.BlockSpec((1, TB, H, W, LANE), lambda b, s: (b, s, 0, 0, 0)),
            pl.BlockSpec((1, H, W, LANE), lambda b, s: (b, 0, 0, 0)),
        ),
        scratch_shapes=[pltpu.VMEM((H + 2, W, LANE), jnp.float32)],
        compiler_params=pltpu.CompilerParams(
            dimension_semantics=("parallel", "arbitrary"),
            vmem_limit_bytes=_VMEM_LIMIT),
    )(xproj, gp["wgh"], gp["wch"], h0)
    return hs, h_last


# ----------------------------------------------------------------------------
# Parameter packing (PyTorch layout -> lane-dense matmul matrices, bf16).
# Done ONCE at model-load time, outside the jitted forward.
# ----------------------------------------------------------------------------
def _pad_cols(m, n):
    return jnp.pad(m, ((0, 0), (0, n - m.shape[1])))


def _pack_conv3d(w, b):
    Cout, Cin = w.shape[0], w.shape[1]
    K = 27 * Cin
    mat = jnp.transpose(w, (2, 3, 4, 1, 0)).reshape(K, Cout)   # rows (kt,kh,kw,ci)
    Kp, Np = _round_up(K, LANE), _round_up(Cout, LANE)
    mat = jnp.pad(mat, ((0, Kp - K), (0, Np - Cout)))
    bias = jnp.pad(b, (0, Np - Cout)).reshape(1, Np).astype(jnp.float32)
    return dict(w=mat.astype(jnp.bfloat16), b=bias)


def _pack_convt_s1(w_t, b):
    # stride-1 ConvTranspose3d (k=3, pad=1) == conv with flipped/transposed kernel
    w_conv = jnp.transpose(jnp.flip(w_t, axis=(2, 3, 4)), (1, 0, 2, 3, 4))
    return _pack_conv3d(w_conv, b)


def _pack_deconv_poly(w_t, b):
    # w_t: (Cin, Cout, 3, 4, 4), stride (1,2,2), pad 1  -> polyphase weights.
    Cin, Cout = w_t.shape[0], w_t.shape[1]
    K = 12 * Cin
    phase_mats, phase_bias = [], []
    for ph in (0, 1):
        for pw in (0, 1):
            rows = []
            for dt in range(3):
                kt = 2 - dt
                for a in range(2):
                    kh = (3 - 2 * a) if ph == 0 else (2 - 2 * a)
                    for bb in range(2):
                        kw = (3 - 2 * bb) if pw == 0 else (2 - 2 * bb)
                        rows.append(w_t[:, :, kt, kh, kw])   # (Cin, Cout)
            mat = jnp.concatenate(rows, axis=0)              # (K, Cout)
            phase_mats.append(_pad_cols(mat, LANE))
            phase_bias.append(jnp.pad(b, (0, LANE - Cout)))
    wmat = jnp.concatenate(phase_mats, axis=1)               # (K, 512)
    Kp = _round_up(K, LANE)
    wmat = jnp.pad(wmat, ((0, Kp - K), (0, 0)))
    bias = jnp.concatenate(phase_bias).reshape(1, 4 * LANE).astype(jnp.float32)
    return dict(w=wmat.astype(jnp.bfloat16), b=bias)


def _pack_gru(wg, bg, wc, bc, in_dim, hid):
    def xmat(w):   # (Cout, in_dim, 3, 3) -> (9*in_dim, Cout), rows (kh,kw,ci)
        return jnp.transpose(w, (2, 3, 1, 0)).reshape(9 * in_dim, w.shape[0])

    rx = xmat(wg[:hid, :in_dim])
    zx = xmat(wg[hid:, :in_dim])
    nx = xmat(wc[:, :in_dim])
    wx = jnp.concatenate(
        [_pad_cols(rx, LANE), _pad_cols(zx, LANE), _pad_cols(nx, LANE)], axis=1)
    K = 9 * in_dim
    Kp = _round_up(K, LANE)
    wx = jnp.pad(wx, ((0, Kp - K), (0, 0)))
    bx = jnp.concatenate([
        jnp.pad(bg[:hid], (0, LANE - hid)),
        jnp.pad(bg[hid:], (0, LANE - hid)),
        jnp.pad(bc, (0, LANE - hid)),
    ]).reshape(1, 3 * LANE).astype(jnp.float32)

    def hblk(v):   # (hid, hid, 3, 3) -> (3, 3, 128, 128) ordered (kh,kw,ci,co)
        t = jnp.transpose(v, (2, 3, 1, 0))
        return jnp.pad(t, ((0, 0), (0, 0), (0, LANE - hid), (0, LANE - hid)))

    gb = jnp.concatenate([hblk(wg[:hid, in_dim:]), hblk(wg[hid:, in_dim:])],
                         axis=-1)                            # (3,3,128,256)
    wgh = jnp.transpose(gb, (0, 2, 1, 3)).reshape(3, LANE, 6 * LANE)
    cb = hblk(wc[:, in_dim:])                                # (3,3,128,128)
    wch = jnp.transpose(cb, (0, 2, 1, 3)).reshape(3, LANE, 3 * LANE)
    return dict(wx=wx.astype(jnp.bfloat16), bx=bx,
                wgh=wgh.astype(jnp.bfloat16), wch=wch.astype(jnp.bfloat16))


_GRU_CFG = {"rnn1": (16, 64), "rnn2": (64, 96), "rnn3": (96, 96),
            "rnn4": (96, 96), "rnn5": (96, 96), "rnn6": (96, 64)}


def pack_params(p):
    kp = {}
    kp["conv1"] = _pack_conv3d(*p["conv1"])
    kp["conv2"] = _pack_conv3d(*p["conv2"])
    kp["conv3"] = _pack_conv3d(*p["conv3"])
    kp["convt1"] = _pack_deconv_poly(*p["convt1"])
    kp["convt2"] = _pack_deconv_poly(*p["convt2"])
    kp["convt3"] = _pack_convt_s1(*p["convt3"])
    for name, (in_dim, hid) in _GRU_CFG.items():
        g = p[name]
        kp[name] = _pack_gru(g["wg"], g["bg"], g["wc"], g["bc"], in_dim, hid)
    w4, b4 = p["convt4"]
    kp["convt4"] = dict(w=w4[:, 0, 0, 0, 0].astype(jnp.float32),
                        b=b4.astype(jnp.float32))
    return kp


# ----------------------------------------------------------------------------
# Deterministic synthetic parameters (shapes match the PyTorch module).
# ----------------------------------------------------------------------------
def init_params(key):
    params = {}

    def nxt():
        nonlocal key
        key, sub = jax.random.split(key)
        return sub

    def conv_p(shape):  # Conv: (Cout, Cin, ...)
        fan_in = 1
        for d in shape[1:]:
            fan_in *= d
        w = jax.random.normal(nxt(), shape, jnp.float32) / jnp.sqrt(float(fan_in))
        bias = jax.random.normal(nxt(), (shape[0],), jnp.float32) * 0.01
        return w, bias

    def convt_p(shape):  # ConvTranspose3d: (Cin, Cout, kt, kh, kw)
        fan_in = shape[0] * shape[2] * shape[3] * shape[4]
        w = jax.random.normal(nxt(), shape, jnp.float32) / jnp.sqrt(float(fan_in))
        bias = jax.random.normal(nxt(), (shape[1],), jnp.float32) * 0.01
        return w, bias

    def gru_p(in_dim, hid):
        wg, bg = conv_p((2 * hid, in_dim + hid, 3, 3))
        wc, bc = conv_p((hid, in_dim + hid, 3, 3))
        return dict(wg=wg, bg=bg, wc=wc, bc=bc)

    params["conv1"] = conv_p((16, 1, 3, 3, 3))
    params["rnn1"] = gru_p(16, 64)
    params["conv2"] = conv_p((64, 64, 3, 3, 3))
    params["rnn2"] = gru_p(64, 96)
    params["conv3"] = conv_p((96, 96, 3, 3, 3))
    params["rnn3"] = gru_p(96, 96)
    params["rnn4"] = gru_p(96, 96)
    params["convt1"] = convt_p((96, 96, 3, 4, 4))
    params["rnn5"] = gru_p(96, 96)
    params["convt2"] = convt_p((96, 96, 3, 4, 4))
    params["rnn6"] = gru_p(96, 64)
    params["convt3"] = convt_p((64, 16, 3, 3, 3))
    params["convt4"] = convt_p((16, 1, 1, 1, 1))
    return params


# ----------------------------------------------------------------------------
# Forward pass (mirrors Nowcasting.forward) -- takes pre-packed params.
# ----------------------------------------------------------------------------
def nowcasting_forward(kp, x):
    # x: (B, 1, T, H, W) float32 -> (B, 1, T, H, W) float32
    xc = jnp.transpose(x, (0, 2, 3, 4, 1))                       # channels-last

    h = conv3d(xc, kp["conv1"]["w"], kp["conv1"]["b"], cin=1,
               stride_hw=1, act="leaky")                          # conv1+lrelu1
    h, s1 = conv_gru(h, kp["rnn1"], in_dim=16, out_act="leaky")   # rnn1+lrelu2
    h = conv3d(h, kp["conv2"]["w"], kp["conv2"]["b"], cin=64,
               stride_hw=2, act="leaky")                          # conv2+lrelu3
    h, s2 = conv_gru(h, kp["rnn2"], in_dim=64, out_act="none")    # rnn2
    h = conv3d(h, kp["conv3"]["w"], kp["conv3"]["b"], cin=96,
               stride_hw=2, act="leaky")                          # conv3+lrelu5
    h, s3 = conv_gru(h, kp["rnn3"], in_dim=96, out_act="leaky")   # rnn3+lrelu6
    h, _ = conv_gru(h, kp["rnn4"], in_dim=96, h0=s3,
                    out_act="leaky")                              # rnn4+lrelu7
    h = deconv3d_poly(h, kp["convt1"]["w"], kp["convt1"]["b"], cin=96,
                      act="leaky")                                # convt1+lrelu8
    h, _ = conv_gru(h, kp["rnn5"], in_dim=96, h0=s2,
                    out_act="leaky")                              # rnn5+lrelu9
    h = deconv3d_poly(h, kp["convt2"]["w"], kp["convt2"]["b"], cin=96,
                      act="leaky")                                # convt2+lrelu10
    h, _ = conv_gru(h, kp["rnn6"], in_dim=96, h0=s1,
                    out_act="none")                               # rnn6
    h = conv3d(h, kp["convt3"]["w"], kp["convt3"]["b"], cin=64,
               stride_hw=1, act="leaky")                          # convt3+lrelu12

    # convt4: 1x1x1 ConvTranspose (16 -> 1) as a plain jnp contraction
    # (an N=1 Pallas matmul would be maximally lane-sparse).
    feat = h[..., :16].astype(jnp.float32)
    y = jnp.einsum("bthwc,c->bthw", feat, kp["convt4"]["w"]) + kp["convt4"]["b"][0]
    return y[:, None, :, :, :]                                    # (B,1,T,H,W)


if __name__ == "__main__":
    key = jax.random.PRNGKey(0)
    pkey, xkey = jax.random.split(key)
    params = init_params(pkey)
    kp = pack_params(params)            # packed once, outside the jitted forward
    _roll_is_numpy_semantics()          # probe roll direction once (cached)

    # Small shapes consistent with the module (spatial divisible by 4).
    B, T, H, W = 2, 4, 32, 32
    x = jax.random.normal(xkey, (B, 1, T, H, W), jnp.float32)

    fwd = jax.jit(nowcasting_forward)
    out = jax.block_until_ready(fwd(kp, x))
    assert out.shape == (B, 1, T, H, W), out.shape
    assert bool(jnp.all(jnp.isfinite(out)))
    print("KERNEL_OK")
</pallas_src>

<mosaic_0001>
module attributes {stable_mosaic.version = 11 : i64} {
  func.func @k(%arg0: memref<8x128xf32, #tpu.memory_space<vmem>>, %arg1: memref<8x128xf32, #tpu.memory_space<vmem>>) attributes {dimension_semantics = [], scalar_prefetch = 0 : i64, scratch_operands = 0 : i64, tpu.core_type = #tpu.core_type<tc>} {
    %c0 = arith.constant 0 : index
    %c0_0 = arith.constant 0 : index
    %0 = vector.load %arg0[%c0, %c0_0] : memref<8x128xf32, #tpu.memory_space<vmem>>, vector<8x128xf32>
    %c1_i32 = arith.constant 1 : i32
    %1 = tpu.dynamic_rotate %0 by %c1_i32 dim 0 : vector<8x128xf32>, i32 -> vector<8x128xf32>
    %c0_1 = arith.constant 0 : index
    %c0_2 = arith.constant 0 : index
    %2 = vector.load %arg1[%c0_1, %c0_2] : memref<8x128xf32, #tpu.memory_space<vmem>>, vector<8x128xf32>
    tpu.vector_store %arg1[%c0_1, %c0_2], %1 {strides = array<i32>} : memref<8x128xf32, #tpu.memory_space<vmem>>, vector<8x128xf32>,
    return
  }
}

</mosaic_0001>

<llo_original>
// kernel: tpu_custom_call.1
$region0: #{tpu_custom_call.1}
  #allocation0 [shape = 'u32[]', space=smem, size = 0x4, offset = 0x4, fixed_abs, tag = 'smem constant byte address 0x4 - core index']
  #allocation1 [shape = 'u32[72,128]{1,0:T(1,128)}', space=vmem, size = 0x9000, scoped, tag = 'internal scratch']
  %s0 = inlined_call_operand.hbm [shape: f32[8,128], index: 0, kind: input, shape index: {}]
  %s1 = inlined_call_operand.hbm [shape: f32[8,128], index: 1, kind: output, shape index: {}]
  %s2 = sld [smem:[#allocation0]]
  $region18: #{tpu_custom_call.1} parent=0
    _
  %s4 = ssub.s32 1, %s2
  %s5 = scalar_select 0, %s4, %s2
  $region1: #{tpu_custom_call.1} parent=0
    #allocation2 [shape = 'u8[4096]{0}', space=vmem, size = 0x1000, scoped, tag = 'input window, operand 0, single buffered']
    #allocation3 [shape = 's32[1]{0}', space=sflag, size = 0x4, scoped, tag = 'scoped memory for tpu_custom_call.1']
    #allocation4 [shape = 's32[1]{0}', space=sflag, size = 0x4, scoped, tag = 'scoped memory for tpu_custom_call.1']
    #allocation5 [shape = 'u8[4096]{0}', space=vmem, size = 0x1000, scoped, tag = 'output window, operand 0, single buffered']
    %6 = vsyncpa [#allocation3], 0
    %7 = vsyncpa [#allocation4], 0
    // Predicated region
    $region2: #{tpu_custom_call.1} parent=1 // pred_check
      _
    $region3: #{tpu_custom_call.1} parent=1 // pred_check_branch
      %9 = sbr.rel (0) target = $region5
    $region4: #{tpu_custom_call.1} parent=1 // pred_region
      %11 = vsyncadd [#allocation3], 0
      %s13 = sshll.u32 %s0, 4
      %s14 = int_to_ptr.hbm [resolvable:$true] %s13
      %s15 = sshll.u32 [#allocation2], 4
      %s16 = int_to_ptr.vmem [resolvable:$true] %s15
      %18 = dma.hbm_to_vmem [thread:$0]  %s14, 128, %s16, [#allocation3]
    $region5: #{tpu_custom_call.1} parent=1 // pred_fallthru
      _
    // Predicated region
    $region6: #{tpu_custom_call.1} parent=1 // pred_check
      _
    $region7: #{tpu_custom_call.1} parent=1 // pred_check_branch
      %20 = sbr.rel (0) target = $region9
    $region8: #{tpu_custom_call.1} parent=1 // pred_region
      %22 = dma.done [#allocation3], 128
    $region9: #{tpu_custom_call.1} parent=1 // pred_fallthru
      _
    %v23 = vld [vmem:[#allocation2] sm:$0xff]
    %v24 = vrot.slane %v23, 7
    %25 = vst [vmem:[#allocation5] sm:$0xff] %v24
    // Predicated region
    $region10: #{tpu_custom_call.1} parent=1 // pred_check
      _
    $region11: #{tpu_custom_call.1} parent=1 // pred_check_branch
      %27 = sbr.rel (0) target = $region13
    $region12: #{tpu_custom_call.1} parent=1 // pred_region
      %29 = vsyncadd [#allocation4], 0
      %s31 = sshll.u32 [#allocation5], 4
      %s32 = int_to_ptr.vmem [resolvable:$true] %s31
      %s33 = sshll.u32 %s1, 4
      %s34 = int_to_ptr.hbm [resolvable:$true] %s33
      %36 = dma.vmem_to_hbm [thread:$0]  %s32, 128, %s34, [#allocation4]
    $region13: #{tpu_custom_call.1} parent=1 // pred_fallthru
      _
    // Predicated region
    $region14: #{tpu_custom_call.1} parent=1 // pred_check
      _
    $region15: #{tpu_custom_call.1} parent=1 // pred_check_branch
      %38 = sbr.rel (0) target = $region17
    $region16: #{tpu_custom_call.1} parent=1 // pred_region
      %40 = dma.done [#allocation4], 128
    $region17: #{tpu_custom_call.1} parent=1 // pred_fallthru
      _
    %41 = vsyncpa [#allocation3], 1
    %42 = vsyncpa [#allocation4], 1

</llo_original>
